<compile_context>
chip_gen: v6e
topology: v6e:2x2x1
jax: 0.10.0
libtpu: 0.0.40
codegen_flags: <defaults>
</compile_context>

<pallas_src>
import functools
import math

import jax
import jax.numpy as jnp
from jax.experimental import pallas as pl
from jax.experimental.pallas import tpu as pltpu

_LANES = 128


def _round_up(n, m):
    return ((n + m - 1) // m) * m


def _block_spec(shape, index_map, buffers=None):
    """BlockSpec with an optional explicit buffer count (graceful fallback)."""
    if buffers is None:
        return pl.BlockSpec(shape, index_map)
    try:
        return pl.BlockSpec(shape, index_map, pipeline_mode=pl.Buffered(buffers))
    except TypeError:  # jax version without the pipeline_mode kwarg
        return pl.BlockSpec(shape, index_map)


def _linear_kernel_1d(x_ref, w_ref, o_ref, *, add_identity):
    """o = x @ w (+ x if center==identity). w is the pre-transposed weight."""
    acc = jnp.dot(x_ref[...], w_ref[...], preferred_element_type=jnp.float32)
    if add_identity:
        acc = acc + x_ref[...].astype(jnp.float32)
    o_ref[...] = acc.astype(o_ref.dtype)


def _linear_kernel_2d(x_ref, w_ref, o_ref, *, add_identity, tn):
    """N-tiled variant: x tile resident, (D, tn) weight slab streamed."""
    acc = jnp.dot(x_ref[...], w_ref[...], preferred_element_type=jnp.float32)
    if add_identity:
        off = pl.multiple_of(pl.program_id(1) * tn, tn)
        acc = acc + x_ref[:, pl.ds(off, tn)].astype(jnp.float32)
    o_ref[...] = acc.astype(o_ref.dtype)


def invertible_linear_forward(
    x,
    weight,
    center="identity",
    *,
    tm=1024,
    tn=512,
    compute_dtype=jnp.bfloat16,
    vmem_budget_bytes=48 * 1024 * 1024,
):
    """Forward pass of InvertibleLinear: y = x @ (center + weight).T.

    center:
      * 'identity' -> kernel computes x @ weight.T + x (identity never built).
      * array      -> folded once in the wrapper: w_t = (center + weight).T.
    compute_dtype: dtype the streamed operands are cast to (None = keep x.dtype).
    """
    B, D = x.shape
    assert weight.shape == (D, D)
    out_dtype = x.dtype

    add_identity = isinstance(center, str)
    if add_identity:
        assert center == "identity"
        w_eff = weight.T
    else:
        center = jnp.asarray(center, dtype=weight.dtype)
        assert center.shape == (D, D)
        w_eff = (center + weight).T  # one-time fold + pre-transpose, MXU-ready

    if compute_dtype is not None:
        xc = x.astype(compute_dtype)
        wc = w_eff.astype(compute_dtype)
    else:
        xc, wc = x, w_eff
    comp_itemsize = jnp.dtype(xc.dtype).itemsize
    out_itemsize = jnp.dtype(out_dtype).itemsize

    # Lane-dense layout: pad tiny feature dims to a full 128-lane vreg so the
    # output stores are unmasked; pad is sliced off at the end.
    D_pad = D if D >= _LANES else _LANES
    if D_pad != D:
        xc = jnp.pad(xc, ((0, 0), (0, D_pad - D)))
        wc = jnp.pad(wc, ((0, D_pad - D), (0, D_pad - D)))

    # Batch tile: at least 2 grid steps when B > 8 so the "parallel" batch
    # axis can shard across v7x's two TensorCores.
    if B <= 8:
        tm_eff = B
    else:
        tm_eff = max(8, min(tm, _round_up(pl.cdiv(B, 2), 8)))

    w_bytes = D_pad * D_pad * comp_itemsize
    use_n_tiling = w_bytes > vmem_budget_bytes // 2

    if not use_n_tiling:
        # --- 1D grid: (D, D) weight resident, batch tiles pipelined. ---
        def vmem_needed(t):
            return (w_bytes                               # resident weight (x1 buffer)
                    + 2 * t * D_pad * comp_itemsize       # double-buffered x tiles
                    + 2 * t * D_pad * out_itemsize)       # double-buffered out tiles

        while tm_eff > 8 and vmem_needed(tm_eff) > vmem_budget_bytes:
            tm_eff = max(8, _round_up(tm_eff // 2, 8))

        vmem_limit = min(64 * 1024 * 1024,
                         max(vmem_needed(tm_eff) + (2 << 20), 32 * 1024 * 1024))
        grid = (pl.cdiv(B, tm_eff),)

        cost = pl.CostEstimate(
            flops=2 * B * D_pad * D_pad,
            transcendentals=0,
            bytes_accessed=(B * D_pad * comp_itemsize
                            + B * D_pad * out_itemsize
                            + D_pad * D_pad * comp_itemsize),
        )
        kernel = functools.partial(_linear_kernel_1d, add_identity=add_identity)
        y = pl.pallas_call(
            kernel,
            out_shape=jax.ShapeDtypeStruct((B, D_pad), out_dtype),
            grid=grid,
            in_specs=[
                # batch tile: advances with the grid -> double-buffered / pipelined
                pl.BlockSpec((tm_eff, D_pad), lambda i: (i, 0)),
                # effective weight: constant block -> resident; single-buffer it
                # (only when there is more than one grid step).
                _block_spec((D_pad, D_pad), lambda i: (0, 0),
                            buffers=1 if grid[0] > 1 else None),
            ],
            out_specs=pl.BlockSpec((tm_eff, D_pad), lambda i: (i, 0)),
            compiler_params=pltpu.CompilerParams(
                dimension_semantics=("parallel",),
                vmem_limit_bytes=int(vmem_limit),
            ),
            cost_estimate=cost,
        )(xc, wc)
    else:
        # --- 2D grid (large D, mainly v7x 64 MiB VMEM): stream (D, tn) weight
        # slabs over a second "parallel" axis; x tile resident across it. ---
        tn_eff = max(_LANES, (min(tn, D_pad) // _LANES) * _LANES)
        while (tn_eff > _LANES
               and 2 * D_pad * tn_eff * comp_itemsize > vmem_budget_bytes // 2):
            tn_eff = max(_LANES, (tn_eff // 2 // _LANES) * _LANES)

        D_pad2 = _round_up(D_pad, tn_eff)
        if D_pad2 != D_pad:
            xc = jnp.pad(xc, ((0, 0), (0, D_pad2 - D_pad)))
            wc = jnp.pad(wc, ((0, D_pad2 - D_pad), (0, D_pad2 - D_pad)))
            D_pad = D_pad2

        def vmem_needed(t):
            return (2 * t * D_pad * comp_itemsize         # resident x (2 bufs over i)
                    + 2 * D_pad * tn_eff * comp_itemsize  # streamed weight slabs
                    + 2 * t * tn_eff * out_itemsize)      # output tiles

        while tm_eff > 8 and vmem_needed(tm_eff) > vmem_budget_bytes:
            tm_eff = max(8, _round_up(tm_eff // 2, 8))

        vmem_limit = min(64 * 1024 * 1024,
                         max(vmem_needed(tm_eff) + (2 << 20), 32 * 1024 * 1024))
        grid = (pl.cdiv(B, tm_eff), D_pad // tn_eff)

        cost = pl.CostEstimate(
            flops=2 * B * D_pad * D_pad,
            transcendentals=0,
            bytes_accessed=(B * D_pad * comp_itemsize
                            + B * D_pad * out_itemsize
                            # weight is re-read once per batch tile
                            + grid[0] * D_pad * D_pad * comp_itemsize),
        )
        kernel = functools.partial(_linear_kernel_2d,
                                   add_identity=add_identity, tn=tn_eff)
        y = pl.pallas_call(
            kernel,
            out_shape=jax.ShapeDtypeStruct((B, D_pad), out_dtype),
            grid=grid,
            in_specs=[
                pl.BlockSpec((tm_eff, D_pad), lambda i, j: (i, 0)),   # x resident over j
                pl.BlockSpec((D_pad, tn_eff), lambda i, j: (0, j)),   # streamed weight slab
            ],
            out_specs=pl.BlockSpec((tm_eff, tn_eff), lambda i, j: (i, j)),
            compiler_params=pltpu.CompilerParams(
                dimension_semantics=("parallel", "parallel"),
                vmem_limit_bytes=int(vmem_limit),
            ),
            cost_estimate=cost,
        )(xc, wc)

    if D_pad != D:
        y = y[:, :D]
    return y


def make_params(n_dim: int, key):
    """Mirror the PyTorch __init__: weight ~ U(-1/sqrt(n_dim), 1/sqrt(n_dim)),
    center = identity."""
    stdv = 1.0 / math.sqrt(n_dim)
    weight = jax.random.uniform(
        key, (n_dim, n_dim), dtype=jnp.float32, minval=-stdv, maxval=stdv
    )
    center = jnp.eye(n_dim, dtype=jnp.float32)
    return weight, center


# TODO(synk): InvertibleLinear.inv (batched linear solve against center+weight)
# has no clean single-Pallas-kernel equivalent; only forward() is implemented.


if __name__ == "__main__":
    key = jax.random.PRNGKey(0)
    k_x, k_w = jax.random.split(key)

    batch = 8
    n_dim = 32

    x = jax.random.normal(k_x, (batch, n_dim), dtype=jnp.float32)
    weight, center = make_params(n_dim, k_w)

    # Reference: same semantics as torch.matmul(x, (center + weight).t()).
    y_ref = x @ (center + weight).T

    # 1) Exact f32 path (identity handled in-kernel, no (D,D) identity built).
    y_f32 = jax.block_until_ready(
        invertible_linear_forward(x, weight, "identity", compute_dtype=None)
    )
    assert y_f32.shape == (batch, n_dim)
    assert jnp.allclose(y_f32, y_ref, atol=1e-5, rtol=1e-5), "f32 mismatch vs reference"

    # 2) Default bf16-streamed path (f32 accumulation): looser tolerance.
    y_bf16 = jax.block_until_ready(invertible_linear_forward(x, weight, "identity"))
    assert jnp.allclose(y_bf16, y_ref, atol=5e-2, rtol=5e-2), "bf16 mismatch vs reference"

    # 3) Explicit-center path (center folded once in the wrapper).
    y_ctr = jax.block_until_ready(
        invertible_linear_forward(x, weight, center, compute_dtype=None)
    )
    assert jnp.allclose(y_ctr, y_ref, atol=1e-5, rtol=1e-5), "explicit-center mismatch"

    print("KERNEL_OK")
</pallas_src>

<mosaic_0001>
module attributes {stable_mosaic.version = 11 : i64} {
  func.func @_linear_kernel_1d(%arg0: i32, %arg1: memref<8x128xf32, #tpu.memory_space<vmem>>, %arg2: memref<128x128xf32, #tpu.memory_space<vmem>>, %arg3: memref<8x128xf32, #tpu.memory_space<vmem>>) attributes {dimension_semantics = [#tpu.dimension_semantics<parallel>], iteration_bounds = array<i64: 1>, scalar_prefetch = 0 : i64, scratch_operands = 0 : i64, tpu.core_type = #tpu.core_type<tc>, window_params = [{transform_indices = @transform_0, window_bounds = array<i64: 8, 128>}, {pipeline_mode = #tpu.pipeline_mode<synchronous>, transform_indices = @transform_1, window_bounds = array<i64: 128, 128>}, {transform_indices = @transform_2, window_bounds = array<i64: 8, 128>}]} {
    %c0 = arith.constant 0 : index
    %c0_0 = arith.constant 0 : index
    %0 = vector.load %arg1[%c0, %c0_0] : memref<8x128xf32, #tpu.memory_space<vmem>>, vector<8x128xf32>
    %c0_1 = arith.constant 0 : index
    %c0_2 = arith.constant 0 : index
    %1 = vector.load %arg2[%c0_1, %c0_2] : memref<128x128xf32, #tpu.memory_space<vmem>>, vector<128x128xf32>
    %cst = arith.constant dense<0.000000e+00> : vector<8x128xf32>
    %2 = tpu.matmul %0, %1, %cst {dimension_numbers = #tpu.dot_dimension_numbers<[1], [0], [0], [1], [0, 0, 1, 1], [], []>} : vector<8x128xf32>, vector<128x128xf32>, vector<8x128xf32> -> vector<8x128xf32>
    %c0_3 = arith.constant 0 : index
    %c0_4 = arith.constant 0 : index
    %3 = vector.load %arg1[%c0_3, %c0_4] : memref<8x128xf32, #tpu.memory_space<vmem>>, vector<8x128xf32>
    %4 = arith.addf %2, %3 : vector<8x128xf32>
    %c0_5 = arith.constant 0 : index
    %c0_6 = arith.constant 0 : index
    %5 = vector.load %arg3[%c0_5, %c0_6] : memref<8x128xf32, #tpu.memory_space<vmem>>, vector<8x128xf32>
    tpu.vector_store %arg3[%c0_5, %c0_6], %4 {strides = array<i32>} : memref<8x128xf32, #tpu.memory_space<vmem>>, vector<8x128xf32>,
    return
  }
  func.func @transform_0(%arg0: i32) -> (i32, i32) {
    %c0_i32 = arith.constant 0 : i32
    %c0_i32_0 = arith.constant 0 : i32
    return %arg0, %c0_i32 : i32, i32
  }
  func.func @transform_1(%arg0: i32) -> (i32, i32) {
    %c0_i32 = arith.constant 0 : i32
    %c0_i32_0 = arith.constant 0 : i32
    %c0_i32_1 = arith.constant 0 : i32
    return %c0_i32, %c0_i32_0 : i32, i32
  }
  func.func @transform_2(%arg0: i32) -> (i32, i32) {
    %c0_i32 = arith.constant 0 : i32
    %c0_i32_0 = arith.constant 0 : i32
    return %arg0, %c0_i32 : i32, i32
  }
}

</mosaic_0001>

<llo_original>
// kernel: tpu_custom_call.1
$region0: #{tpu_custom_call.1}
  #allocation0 [shape = 'u32[]', space=smem, size = 0x4, offset = 0x4, fixed_abs, tag = 'smem constant byte address 0x4 - core index']
  #allocation1 [shape = 'u32[144,128]{1,0:T(1,128)}', space=vmem, size = 0x12000, scoped, tag = 'internal scratch']
  %s0 = inlined_call_operand.hbm [shape: f32[8,128], index: 0, kind: input, shape index: {}]
  %s1 = inlined_call_operand.hbm [shape: f32[128,128], index: 1, kind: input, shape index: {}]
  %s2 = inlined_call_operand.hbm [shape: f32[8,128], index: 2, kind: output, shape index: {}]
  %s3 = sld [smem:[#allocation0]]
  $region26: #{tpu_custom_call.1} parent=0
    _
  %s5 = ssub.s32 1, %s3
  %s6 = scalar_select 0, %s5, %s3
  $region1: #{tpu_custom_call.1} parent=0
    #allocation2 [shape = 'u8[4096]{0}', space=vmem, size = 0x1000, scoped, tag = 'input window, operand 0, single buffered']
    #allocation3 [shape = 's32[1]{0}', space=sflag, size = 0x4, scoped, tag = 'scoped memory for tpu_custom_call.1']
    #allocation4 [shape = 's32[1]{0}', space=sflag, size = 0x4, scoped, tag = 'scoped memory for tpu_custom_call.1']
    #allocation5 [shape = 'u8[65536]{0}', space=vmem, size = 0x10000, scoped, tag = 'input window, operand 1, single buffered']
    #allocation6 [shape = 's32[1]{0}', space=sflag, size = 0x4, scoped, tag = 'scoped memory for tpu_custom_call.1']
    #allocation7 [shape = 'u8[4096]{0}', space=vmem, size = 0x1000, scoped, tag = 'output window, operand 0, single buffered']
    %7 = vsyncpa [#allocation3], 0
    %8 = vsyncpa [#allocation6], 0
    %9 = vsyncpa [#allocation4], 0
    // Predicated region
    $region2: #{tpu_custom_call.1} parent=1 // pred_check
      _
    $region3: #{tpu_custom_call.1} parent=1 // pred_check_branch
      %11 = sbr.rel (0) target = $region5
    $region4: #{tpu_custom_call.1} parent=1 // pred_region
      %s13 = ssub.s32 128, 128
      %14 = vsyncadd [#allocation3], %s13
      %s16 = sshll.u32 [#allocation2], 4
      %s17 = int_to_ptr.vmem [resolvable:$true] %s16
      %19 = dma.hbm_to_vmem [thread:$0]  %s0, 128, %s17, [#allocation3]
    $region5: #{tpu_custom_call.1} parent=1 // pred_fallthru
      _
    // Predicated region
    $region6: #{tpu_custom_call.1} parent=1 // pred_check
      _
    $region7: #{tpu_custom_call.1} parent=1 // pred_check_branch
      %21 = sbr.rel (0) target = $region9
    $region8: #{tpu_custom_call.1} parent=1 // pred_region
      %s23 = ssub.s32 2048, 2048
      %24 = vsyncadd [#allocation6], %s23
      %s25 = sshll.u32 [#allocation5], 4
      %s26 = int_to_ptr.vmem [resolvable:$true] %s25
      %31 = dma.hbm_to_vmem [thread:$0]  %s1, 2048, %s26, [#allocation6], 128, 128, 8
    $region9: #{tpu_custom_call.1} parent=1 // pred_fallthru
      _
    // Predicated region
    $region10: #{tpu_custom_call.1} parent=1 // pred_check
      _
    $region11: #{tpu_custom_call.1} parent=1 // pred_check_branch
      %33 = sbr.rel (0) target = $region13
    $region12: #{tpu_custom_call.1} parent=1 // pred_region
      %34 = dma.done [#allocation3], 128
    $region13: #{tpu_custom_call.1} parent=1 // pred_fallthru
      _
    // Predicated region
    $region14: #{tpu_custom_call.1} parent=1 // pred_check
      _
    $region15: #{tpu_custom_call.1} parent=1 // pred_check_branch
      %36 = sbr.rel (0) target = $region17
    $region16: #{tpu_custom_call.1} parent=1 // pred_region
      %37 = dma.done [#allocation6], 2048
    $region17: #{tpu_custom_call.1} parent=1 // pred_fallthru
      _
    %v38 = vld [vmem:[#allocation2] sm:$0xff]
    %v39 = vld [vmem:[#allocation5] sm:$0xff]
    %v40 = vld [vmem:[#allocation5 + $0x8] sm:$0xff]
    %v41 = vld [vmem:[#allocation5 + $0x10] sm:$0xff]
    %v42 = vld [vmem:[#allocation5 + $0x18] sm:$0xff]
    %v43 = vld [vmem:[#allocation5 + $0x20] sm:$0xff]
    %v44 = vld [vmem:[#allocation5 + $0x28] sm:$0xff]
    %v45 = vld [vmem:[#allocation5 + $0x30] sm:$0xff]
    %v46 = vld [vmem:[#allocation5 + $0x38] sm:$0xff]
    %v47 = vld [vmem:[#allocation5 + $0x40] sm:$0xff]
    %v48 = vld [vmem:[#allocation5 + $0x48] sm:$0xff]
    %v49 = vld [vmem:[#allocation5 + $0x50] sm:$0xff]
    %v50 = vld [vmem:[#allocation5 + $0x58] sm:$0xff]
    %v51 = vld [vmem:[#allocation5 + $0x60] sm:$0xff]
    %v52 = vld [vmem:[#allocation5 + $0x68] sm:$0xff]
    %v53 = vld [vmem:[#allocation5 + $0x70] sm:$0xff]
    %v54 = vld [vmem:[#allocation5 + $0x78] sm:$0xff]
    %55 = vmatprep.subr.mxu0 0.0
    %56 = vmatpush1.msra.mxu0 %v54
    %57 = vmatprep.subr.mxu0 0.0
    %58 = vmatpush1.msra.mxu0 %v53
    %59 = vmatprep.subr.mxu0 0.0
    %60 = vmatpush1.msra.mxu0 %v52
    %61 = vmatprep.subr.mxu0 0.0
    %62 = vmatpush1.msra.mxu0 %v51
    %63 = vmatprep.subr.mxu0 0.0
    %64 = vmatpush1.msra.mxu0 %v50
    %65 = vmatprep.subr.mxu0 0.0
    %66 = vmatpush1.msra.mxu0 %v49
    %67 = vmatprep.subr.mxu0 0.0
    %68 = vmatpush1.msra.mxu0 %v48
    %69 = vmatprep.subr.mxu0 0.0
    %70 = vmatpush1.msra.mxu0 %v47
    %71 = vmatprep.subr.mxu0 0.0
    %72 = vmatpush1.msra.mxu0 %v46
    %73 = vmatprep.subr.mxu0 0.0
    %74 = vmatpush1.msra.mxu0 %v45
    %75 = vmatprep.subr.mxu0 0.0
    %76 = vmatpush1.msra.mxu0 %v44
    %77 = vmatprep.subr.mxu0 0.0
    %78 = vmatpush1.msra.mxu0 %v43
    %79 = vmatprep.subr.mxu0 0.0
    %80 = vmatpush1.msra.mxu0 %v42
    %81 = vmatprep.subr.mxu0 0.0
    %82 = vmatpush1.msra.mxu0 %v41
    %83 = vmatprep.subr.mxu0 0.0
    %84 = vmatpush1.msra.mxu0 %v40
    %85 = vmatprep.subr.mxu0 0.0
    %86 = vmatpush1.msra.mxu0 %v39
    %87 = vmatprep.subr.mxu0 0.0
    %88 = vmatpush2.msra.mxu0 0.0
    %89 = vmatprep.subr.mxu0 0.0
    %90 = vmatpush2.msra.mxu0 0.0
    %91 = vmatprep.subr.mxu0 0.0
    %92 = vmatpush2.msra.mxu0 0.0
    %93 = vmatprep.subr.mxu0 0.0
    %94 = vmatpush2.msra.mxu0 0.0
    %95 = vmatprep.subr.mxu0 0.0
    %96 = vmatpush2.msra.mxu0 0.0
    %97 = vmatprep.subr.mxu0 0.0
    %98 = vmatpush2.msra.mxu0 0.0
    %99 = vmatprep.subr.mxu0 0.0
    %100 = vmatpush2.msra.mxu0 0.0
    %101 = vmatprep.subr.mxu0 0.0
    %102 = vmatpush2.msra.mxu0 0.0
    %103 = vmatprep.subr.mxu0 0.0
    %104 = vmatpush2.msra.mxu0 0.0
    %105 = vmatprep.subr.mxu0 0.0
    %106 = vmatpush2.msra.mxu0 0.0
    %107 = vmatprep.subr.mxu0 0.0
    %108 = vmatpush2.msra.mxu0 0.0
    %109 = vmatprep.subr.mxu0 0.0
    %110 = vmatpush2.msra.mxu0 0.0
    %111 = vmatprep.subr.mxu0 0.0
    %112 = vmatpush2.msra.mxu0 0.0
    %113 = vmatprep.subr.mxu0 0.0
    %114 = vmatpush2.msra.mxu0 0.0
    %115 = vmatprep.subr.mxu0 0.0
    %116 = vmatpush2.msra.mxu0 0.0
    %117 = vmatprep.subr.mxu0 0.0
    %118 = vmatpush2.msra.mxu0 0.0
    %119 = vmatprep.mubr.f32.mxu0 0.0
    %120 = vmatmul.mubr.f32.gmra.mxu0 %v38
    %v121 = vpop.f32.mrf.mxu0
    %v122 = vadd.f32 %v38, %v121
    %v123 = vpop.f32.mrf.mxu0
    %124 = vdwg.mxu0
    %125 = vst [vmem:[#allocation7] sm:$0xff] %v122
    // Predicated region
    $region18: #{tpu_custom_call.1} parent=1 // pred_check
      _
    $region19: #{tpu_custom_call.1} parent=1 // pred_check_branch
      %127 = sbr.rel (0) target = $region21
    $region20: #{tpu_custom_call.1} parent=1 // pred_region
      %s129 = ssub.s32 128, 128
      %130 = vsyncadd [#allocation4], %s129
      %s132 = sshll.u32 [#allocation7], 4
      %s133 = int_to_ptr.vmem [resolvable:$true] %s132
      %135 = dma.vmem_to_hbm [thread:$0]  %s133, 128, %s2, [#allocation4]
    $region21: #{tpu_custom_call.1} parent=1 // pred_fallthru
      _
    // Predicated region
    $region22: #{tpu_custom_call.1} parent=1 // pred_check
      _
    $region23: #{tpu_custom_call.1} parent=1 // pred_check_branch
      %137 = sbr.rel (0) target = $region25
    $region24: #{tpu_custom_call.1} parent=1 // pred_region
      %138 = dma.done [#allocation4], 128
    $region25: #{tpu_custom_call.1} parent=1 // pred_fallthru
      _
    %139 = vsyncpa [#allocation3], 1
    %140 = vsyncpa [#allocation6], 1
    %141 = vsyncpa [#allocation4], 1

</llo_original>
